<compile_context>
chip_gen: v7x
topology: tpu7x:2x2x1
jax: 0.10.0
libtpu: 0.0.40
codegen_flags: <defaults>
</compile_context>

<pallas_src>
import functools

import jax
import jax.numpy as jnp
from jax.experimental import pallas as pl
from jax.experimental.pallas import tpu as pltpu


def _round_up(x, m):
    return ((x + m - 1) // m) * m


def _mpl_kernel(max_step_ref,   # SMEM (nb,)    int32 : max(step) per row block
                params_ref,     # SMEM (7,)     f32   : L0, A, alpha, B, C, beta, gamma
                rows_ref,       # VMEM (8,Tblk) f32   : 0=lr_gap (gap[0]=0), 1=c_k, 2=lr_sum[k-1]
                lr_sum_s_ref,   # VMEM (Nblk,1) f32   : lr_sum[step[i]]
                pred_base_ref,  # VMEM (Nblk,1) f32   : L0 + A*S1^(-alpha)
                log_loss_ref,   # VMEM (Nblk,1) f32   : log(loss)
                out_ref,        # VMEM (Nblk,1) f32   : per-row huber (written at last kt)
                ld_acc,         # VMEM scratch (Nblk,128) f32 : per-lane partial LD
                *, t_block):
    ni = pl.program_id(0)
    kt = pl.program_id(1)

    @pl.when(kt == 0)
    def _init():
        ld_acc[...] = jnp.zeros_like(ld_acc)

    # Skip schedule tiles entirely above the triangular structure k <= step[i].
    @pl.when(kt * t_block <= max_step_ref[ni])
    def _tile():
        beta = params_ref[5]
        lr_sum_s = lr_sum_s_ref[...]                          # (Nblk, 1)

        # 128-lane chunks: bounds live ranges (no full-tile temporaries) and
        # accumulates with plain VPU adds; XLU reduce deferred to the epilogue.
        for j in range(t_block // 128):
            sl = slice(j * 128, (j + 1) * 128)
            lr_gap_c = rows_ref[0:1, sl]                      # (1, 128)
            c_k_c = rows_ref[1:2, sl]                         # (1, 128) = C*lrs^(-gamma)
            prev_c = rows_ref[2:3, sl]                        # (1, 128) = lr_sum[k-1]

            u = c_k_c * (lr_sum_s - prev_c)                   # (Nblk, 128)
            u = jnp.maximum(u, 0.0)                           # k > step / padding -> 0
            drop = 1.0 - jnp.exp(-beta * jnp.log(1.0 + u))    # 1 - (1+u)^(-beta)
            ld_acc[...] += lr_gap_c * drop

    @pl.when(kt == pl.num_programs(1) - 1)
    def _epilogue():
        B = params_ref[3]
        ld = jnp.sum(ld_acc[...], axis=1, keepdims=True)      # (Nblk, 1), one XLU reduce
        pred = jnp.maximum(pred_base_ref[...] + B * ld, 1e-10)
        r = log_loss_ref[...] - jnp.log(pred)
        delta = jnp.float32(0.001)
        absr = jnp.abs(r)
        out_ref[...] = jnp.where(absr <= delta, 0.5 * r * r,
                                 delta * (absr - 0.5 * delta))


def mpl_forward(params, S1, lrs, lr_sum, step, lr_gap, loss,
                *, n_block=256, t_block=2048):
    """params = [L0, A, alpha, B, C, beta, gamma] (float32, shape (7,)).

    Assumes lrs >= 0 (so lr_sum is non-decreasing) and S1, loss > 0, as the
    MPL model itself requires.
    """
    f32 = jnp.float32
    N = int(step.shape[0])
    T = int(lrs.shape[0])

    # Row-block size: aim for >=2 row blocks when N allows (v7x has 2 TCs and
    # only the "parallel" grid axis is sharded across them).
    nblk = min(n_block, _round_up(max((N + 1) // 2, 1), 8))
    tblk = min(t_block, _round_up(T, 128))
    Np = _round_up(N, nblk)
    Tp = _round_up(T, tblk)
    nb = Np // nblk
    kb = Tp // tblk

    L0, A, alpha, B, C, beta, gamma = (params[i].astype(f32) for i in range(7))

    lrs_f = lrs.astype(f32)
    lr_sum_f = lr_sum.astype(f32)
    lr_gap_f = lr_gap.astype(f32)

    # Host-side O(T) precompute, packed into one (8, Tp) slab -> one DMA per tile.
    lr_sum_prev = jnp.concatenate([jnp.zeros((1,), f32), lr_sum_f[:-1]])
    c_k = C * jnp.maximum(lrs_f, 1e-30) ** (-gamma)   # C * lrs^(-gamma)
    c_k = c_k.at[0].set(0.0)                          # k = 0 never contributes
    lr_gap_z = lr_gap_f.at[0].set(0.0)                # sum starts at k = 1
    rows = jnp.zeros((8, Tp), f32)
    rows = rows.at[0, :T].set(lr_gap_z)
    rows = rows.at[1, :T].set(c_k)
    rows = rows.at[2, :T].set(lr_sum_prev)

    # Sort rows by step so the per-row-block tile skip fires; the result is a
    # sum over rows, so no un-permute is needed.
    order = jnp.argsort(step)
    step_s = step[order].astype(jnp.int32)
    S1_s = S1[order].astype(f32)
    loss_s = loss[order].astype(f32)

    lr_sum_s = lr_sum_f[step_s]                       # gather done outside the kernel
    pred_base = L0 + A * S1_s ** (-alpha)             # O(N) transcendentals host-side

    lr_sum_s_p = jnp.zeros((Np, 1), f32).at[:N, 0].set(lr_sum_s)
    pred_base_p = jnp.ones((Np, 1), f32).at[:N, 0].set(pred_base)
    log_loss_p = jnp.zeros((Np, 1), f32).at[:N, 0].set(jnp.log(loss_s))

    step_p = jnp.zeros((Np,), jnp.int32).at[:N].set(step_s)
    max_step_blk = jnp.max(step_p.reshape(nb, nblk), axis=1).astype(jnp.int32)

    huber_rows = pl.pallas_call(
        functools.partial(_mpl_kernel, t_block=tblk),
        out_shape=jax.ShapeDtypeStruct((Np, 1), f32),
        grid=(nb, kb),
        in_specs=[
            pl.BlockSpec(memory_space=pltpu.MemorySpace.SMEM),   # max_step_blk
            pl.BlockSpec(memory_space=pltpu.MemorySpace.SMEM),   # params
            pl.BlockSpec((8, tblk), lambda ni, kt: (0, kt)),     # packed row slab
            pl.BlockSpec((nblk, 1), lambda ni, kt: (ni, 0)),     # lr_sum[step]
            pl.BlockSpec((nblk, 1), lambda ni, kt: (ni, 0)),     # pred_base
            pl.BlockSpec((nblk, 1), lambda ni, kt: (ni, 0)),     # log(loss)
        ],
        out_specs=pl.BlockSpec((nblk, 1), lambda ni, kt: (ni, 0)),
        scratch_shapes=[pltpu.VMEM((nblk, 128), f32)],
        compiler_params=pltpu.CompilerParams(
            dimension_semantics=("parallel", "arbitrary"),
            vmem_limit_bytes=48 * 1024 * 1024),
    )(max_step_blk, jnp.asarray(params, f32), rows,
      lr_sum_s_p, pred_base_p, log_loss_p)

    # Final scalar reduction over valid rows (tiny; done outside the kernel).
    return jnp.sum(huber_rows[:N, 0])


if __name__ == "__main__":
    key = jax.random.PRNGKey(0)
    k1, k2 = jax.random.split(key)

    T = 32   # schedule length (steps 0..T-1)
    N = 8    # number of query steps

    t = jnp.arange(T, dtype=jnp.float32)
    lrs = 0.01 * (1.0 - 0.8 * t / T)                  # positive, decaying LR schedule
    lr_sum = jnp.cumsum(lrs)                          # cumulative LR sum
    lr_gap = jnp.concatenate([jnp.zeros((1,), jnp.float32), lrs[1:] - lrs[:-1]])

    step = jax.random.randint(k1, (N,), 1, T)         # step indices in [1, T-1]
    S1 = lr_sum[step]                                 # cumulative LR sum at those steps
    loss = 2.0 + jax.random.uniform(k2, (N,), jnp.float32)

    # deterministic parameters: L0, A, alpha, B, C, beta, gamma
    params = jnp.array([2.5, 0.5, 0.5, 0.3, 1.0, 0.5, 0.5], jnp.float32)

    out = mpl_forward(params, S1, lrs, lr_sum, step, lr_gap, loss)
    jax.block_until_ready(out)
    print("KERNEL_OK")
</pallas_src>

<mosaic_0001>
module attributes {stable_mosaic.version = 11 : i64} {
  func.func @_mpl_kernel(%arg0: i32, %arg1: i32, %arg2: memref<1xi32, #tpu.memory_space<smem>>, %arg3: memref<7xf32, #tpu.memory_space<smem>>, %arg4: memref<8x128xf32, #tpu.memory_space<vmem>>, %arg5: memref<8x1xf32, #tpu.memory_space<vmem>>, %arg6: memref<8x1xf32, #tpu.memory_space<vmem>>, %arg7: memref<8x1xf32, #tpu.memory_space<vmem>>, %arg8: memref<8x1xf32, #tpu.memory_space<vmem>>, %arg9: memref<8x128xf32, #tpu.memory_space<vmem>>) attributes {dimension_semantics = [#tpu.dimension_semantics<parallel>, #tpu.dimension_semantics<arbitrary>], iteration_bounds = array<i64: 1, 1>, scalar_prefetch = 0 : i64, scratch_operands = 1 : i64, tpu.core_type = #tpu.core_type<tc>, window_params = [{transform_indices = @transform_0, window_bounds = array<i64: 1>}, {transform_indices = @transform_1, window_bounds = array<i64: 7>}, {transform_indices = @transform_2, window_bounds = array<i64: 8, 128>}, {transform_indices = @transform_3, window_bounds = array<i64: 8, 1>}, {transform_indices = @transform_4, window_bounds = array<i64: 8, 1>}, {transform_indices = @transform_5, window_bounds = array<i64: 8, 1>}, {transform_indices = @transform_6, window_bounds = array<i64: 8, 1>}]} {
    %c0_i32 = arith.constant 0 : i32
    %0 = arith.cmpi eq, %arg1, %c0_i32 : i32
    %1 = arith.extui %0 : i1 to i32
    %c0_i32_0 = arith.constant 0 : i32
    %2 = arith.cmpi ne, %1, %c0_i32_0 : i32
    scf.if %2 {
      %cst = arith.constant 0.000000e+00 : f32
      %12 = vector.broadcast %cst : f32 to vector<8x128xf32>
      %c0 = arith.constant 0 : index
      %c0_4 = arith.constant 0 : index
      %13 = vector.load %arg9[%c0, %c0_4] : memref<8x128xf32, #tpu.memory_space<vmem>>, vector<8x128xf32>
      tpu.vector_store %arg9[%c0, %c0_4], %12 {strides = array<i32>} : memref<8x128xf32, #tpu.memory_space<vmem>>, vector<8x128xf32>,
    } else {
    }
    %c128_i32 = arith.constant 128 : i32
    %3 = arith.muli %arg1, %c128_i32 : i32
    %4 = arith.index_cast %arg0 : i32 to index
    %5 = memref.load %arg2[%4] : memref<1xi32, #tpu.memory_space<smem>>
    %6 = arith.cmpi sle, %3, %5 : i32
    %7 = arith.extui %6 : i1 to i32
    %c0_i32_1 = arith.constant 0 : i32
    %8 = arith.cmpi ne, %7, %c0_i32_1 : i32
    scf.if %8 {
      %c5 = arith.constant 5 : index
      %12 = memref.load %arg3[%c5] : memref<7xf32, #tpu.memory_space<smem>>
      %c0 = arith.constant 0 : index
      %c0_4 = arith.constant 0 : index
      %13 = vector.load %arg5[%c0, %c0_4] : memref<8x1xf32, #tpu.memory_space<vmem>>, vector<8x1xf32>
      %c0_5 = arith.constant 0 : index
      %c0_6 = arith.constant 0 : index
      %14 = vector.load %arg4[%c0_5, %c0_6] : memref<8x128xf32, #tpu.memory_space<vmem>>, vector<1x128xf32>
      %c1 = arith.constant 1 : index
      %c0_7 = arith.constant 0 : index
      %15 = vector.load %arg4[%c1, %c0_7] : memref<8x128xf32, #tpu.memory_space<vmem>>, vector<1x128xf32>
      %c2 = arith.constant 2 : index
      %c0_8 = arith.constant 0 : index
      %16 = vector.load %arg4[%c2, %c0_8] : memref<8x128xf32, #tpu.memory_space<vmem>>, vector<1x128xf32>
      %17 = vector.broadcast %13 : vector<8x1xf32> to vector<8x128xf32>
      %18 = vector.broadcast %16 : vector<1x128xf32> to vector<8x128xf32>
      %19 = arith.subf %17, %18 : vector<8x128xf32>
      %20 = vector.broadcast %15 : vector<1x128xf32> to vector<8x128xf32>
      %21 = arith.mulf %20, %19 : vector<8x128xf32>
      %cst = arith.constant 0.000000e+00 : f32
      %22 = vector.broadcast %cst : f32 to vector<8x128xf32>
      %23 = arith.maximumf %21, %22 : vector<8x128xf32>
      %cst_9 = arith.constant 0.000000e+00 : f32
      %24 = arith.subf %cst_9, %12 : f32
      %cst_10 = arith.constant 1.000000e+00 : f32
      %25 = vector.broadcast %cst_10 : f32 to vector<8x128xf32>
      %26 = arith.addf %25, %23 : vector<8x128xf32>
      %27 = math.log %26 : vector<8x128xf32>
      %28 = vector.broadcast %24 : f32 to vector<8x128xf32>
      %29 = arith.mulf %28, %27 : vector<8x128xf32>
      %30 = math.exp %29 : vector<8x128xf32>
      %cst_11 = arith.constant 1.000000e+00 : f32
      %31 = vector.broadcast %cst_11 : f32 to vector<8x128xf32>
      %32 = arith.subf %31, %30 : vector<8x128xf32>
      %c0_12 = arith.constant 0 : index
      %c0_13 = arith.constant 0 : index
      %33 = vector.load %arg9[%c0_12, %c0_13] : memref<8x128xf32, #tpu.memory_space<vmem>>, vector<8x128xf32>
      %34 = vector.broadcast %14 : vector<1x128xf32> to vector<8x128xf32>
      %35 = arith.mulf %34, %32 : vector<8x128xf32>
      %36 = arith.addf %33, %35 : vector<8x128xf32>
      %c0_14 = arith.constant 0 : index
      %c0_15 = arith.constant 0 : index
      %37 = vector.load %arg9[%c0_14, %c0_15] : memref<8x128xf32, #tpu.memory_space<vmem>>, vector<8x128xf32>
      tpu.vector_store %arg9[%c0_14, %c0_15], %36 {strides = array<i32>} : memref<8x128xf32, #tpu.memory_space<vmem>>, vector<8x128xf32>,
    } else {
    }
    %c0_i32_2 = arith.constant 0 : i32
    %9 = arith.cmpi eq, %arg1, %c0_i32_2 : i32
    %10 = arith.extui %9 : i1 to i32
    %c0_i32_3 = arith.constant 0 : i32
    %11 = arith.cmpi ne, %10, %c0_i32_3 : i32
    scf.if %11 {
      %c3 = arith.constant 3 : index
      %12 = memref.load %arg3[%c3] : memref<7xf32, #tpu.memory_space<smem>>
      %c0 = arith.constant 0 : index
      %c0_4 = arith.constant 0 : index
      %13 = vector.load %arg9[%c0, %c0_4] : memref<8x128xf32, #tpu.memory_space<vmem>>, vector<8x128xf32>
      %cst = arith.constant dense<0.000000e+00> : vector<8xf32>
      %14 = vector.multi_reduction <add>, %13, %cst [1] : vector<8x128xf32> to vector<8xf32>
      %15 = vector.shape_cast %14 : vector<8xf32> to vector<8x1xf32>
      %c0_5 = arith.constant 0 : index
      %c0_6 = arith.constant 0 : index
      %16 = vector.load %arg6[%c0_5, %c0_6] : memref<8x1xf32, #tpu.memory_space<vmem>>, vector<8x1xf32>
      %17 = vector.broadcast %12 : f32 to vector<8x1xf32>
      %18 = arith.mulf %17, %15 : vector<8x1xf32>
      %19 = arith.addf %16, %18 : vector<8x1xf32>
      %cst_7 = arith.constant 1.000000e-10 : f32
      %20 = vector.broadcast %cst_7 : f32 to vector<8x1xf32>
      %21 = arith.maximumf %19, %20 : vector<8x1xf32>
      %c0_8 = arith.constant 0 : index
      %c0_9 = arith.constant 0 : index
      %22 = vector.load %arg7[%c0_8, %c0_9] : memref<8x1xf32, #tpu.memory_space<vmem>>, vector<8x1xf32>
      %23 = math.log %21 : vector<8x1xf32>
      %24 = arith.subf %22, %23 : vector<8x1xf32>
      %25 = math.absf %24 : vector<8x1xf32>
      %cst_10 = arith.constant 1.000000e-03 : f32
      %26 = vector.broadcast %cst_10 : f32 to vector<8x1xf32>
      %27 = arith.cmpf ole, %25, %26 : vector<8x1xf32>
      %cst_11 = arith.constant 5.000000e-01 : f32
      %28 = vector.broadcast %cst_11 : f32 to vector<8x1xf32>
      %29 = arith.mulf %28, %24 : vector<8x1xf32>
      %30 = arith.mulf %29, %24 : vector<8x1xf32>
      %cst_12 = arith.constant 5.000000e-01 : f32
      %cst_13 = arith.constant 1.000000e-03 : f32
      %31 = arith.mulf %cst_12, %cst_13 : f32
      %32 = vector.broadcast %31 : f32 to vector<8x1xf32>
      %33 = arith.subf %25, %32 : vector<8x1xf32>
      %cst_14 = arith.constant 1.000000e-03 : f32
      %34 = vector.broadcast %cst_14 : f32 to vector<8x1xf32>
      %35 = arith.mulf %34, %33 : vector<8x1xf32>
      %36 = arith.select %27, %30, %35 : vector<8x1xi1>, vector<8x1xf32>
      %c0_15 = arith.constant 0 : index
      %c0_16 = arith.constant 0 : index
      %37 = vector.load %arg8[%c0_15, %c0_16] : memref<8x1xf32, #tpu.memory_space<vmem>>, vector<8x1xf32>
      tpu.vector_store %arg8[%c0_15, %c0_16], %36 {strides = array<i32>} : memref<8x1xf32, #tpu.memory_space<vmem>>, vector<8x1xf32>,
    } else {
    }
    return
  }
  func.func @transform_0(%arg0: i32, %arg1: i32) -> i32 {
    %c0_i32 = arith.constant 0 : i32
    %c0_i32_0 = arith.constant 0 : i32
    return %c0_i32 : i32
  }
  func.func @transform_1(%arg0: i32, %arg1: i32) -> i32 {
    %c0_i32 = arith.constant 0 : i32
    %c0_i32_0 = arith.constant 0 : i32
    return %c0_i32 : i32
  }
  func.func @transform_2(%arg0: i32, %arg1: i32) -> (i32, i32) {
    %c0_i32 = arith.constant 0 : i32
    %c0_i32_0 = arith.constant 0 : i32
    return %c0_i32, %arg1 : i32, i32
  }
  func.func @transform_3(%arg0: i32, %arg1: i32) -> (i32, i32) {
    %c0_i32 = arith.constant 0 : i32
    %c0_i32_0 = arith.constant 0 : i32
    return %arg0, %c0_i32 : i32, i32
  }
  func.func @transform_4(%arg0: i32, %arg1: i32) -> (i32, i32) {
    %c0_i32 = arith.constant 0 : i32
    %c0_i32_0 = arith.constant 0 : i32
    return %arg0, %c0_i32 : i32, i32
  }
  func.func @transform_5(%arg0: i32, %arg1: i32) -> (i32, i32) {
    %c0_i32 = arith.constant 0 : i32
    %c0_i32_0 = arith.constant 0 : i32
    return %arg0, %c0_i32 : i32, i32
  }
  func.func @transform_6(%arg0: i32, %arg1: i32) -> (i32, i32) {
    %c0_i32 = arith.constant 0 : i32
    %c0_i32_0 = arith.constant 0 : i32
    return %arg0, %c0_i32 : i32, i32
  }
}

</mosaic_0001>

<llo_original>
// kernel: tpu_custom_call.1
$region0: #{tpu_custom_call.1}
  #allocation0 [shape = 'u32[]', space=smem, size = 0x4, offset = 0x4, fixed_abs, tag = 'smem constant byte address 0x4 - core index']
  #allocation1 [shape = 'u32[144,128]{1,0:T(1,128)}', space=vmem, size = 0x12000, scoped, tag = 'internal scratch']
  #allocation2 [shape = 'f32[8,128]{1,0:T(8,128)}', space=vmem, size = 0x1000, scoped, tag = 'scratch operand']
  #allocation3 [shape = 's32[1]{0:T(128)S(6)}', space=smem, size = 0x200, scoped, tag = 'scoped memory for tpu_custom_call.1']
  %s0 = inlined_call_operand.<no memory space> [shape: s32[1], index: 0, kind: input, shape index: {}]
  %s1 = inlined_call_operand.vmem [shape: f32[7], index: 1, kind: input, shape index: {}]
  %s2 = inlined_call_operand.vmem [shape: f32[8,128], index: 2, kind: input, shape index: {}]
  %s3 = inlined_call_operand.vmem [shape: f32[8,1], index: 3, kind: input, shape index: {}]
  %s4 = inlined_call_operand.vmem [shape: f32[8,1], index: 4, kind: input, shape index: {}]
  %s5 = inlined_call_operand.vmem [shape: f32[8,1], index: 5, kind: input, shape index: {}]
  %s6 = inlined_call_operand.vmem [shape: f32[8,1], index: 6, kind: output, shape index: {}]
  %s7 = sld [smem:[#allocation0]]
  $region50: #{tpu_custom_call.1} parent=0
    _
  %s9 = ssub.s32 1, %s7
  %s10 = scalar_select 0, %s9, %s7
  %11 = sst [smem:[#allocation3]] %s0
  $region1: #{tpu_custom_call.1} parent=0
    #allocation4 [shape = 'u8[512]{0}', space=smem, size = 0x200, scoped, tag = 'input window, operand 1, single buffered']
    #allocation5 [shape = 's32[1]{0}', space=sflag, size = 0x4, scoped, tag = 'scoped memory for tpu_custom_call.1']
    %12 = vsyncpa [#allocation5], 0
    // Predicated region
    $region2: #{tpu_custom_call.1} parent=1 // pred_check
      _
    $region3: #{tpu_custom_call.1} parent=1 // pred_check_branch
      %14 = sbr.rel (0) target = $region5
    $region4: #{tpu_custom_call.1} parent=1 // pred_region
      _
    $region5: #{tpu_custom_call.1} parent=1 // pred_fallthru
      _
    // Predicated region
    $region6: #{tpu_custom_call.1} parent=1 // pred_check
      _
    $region7: #{tpu_custom_call.1} parent=1 // pred_check_branch
      %16 = sbr.rel (0) target = $region9
    $region8: #{tpu_custom_call.1} parent=1 // pred_region
      %s18 = ssub.s32 16, 16
      %19 = vsyncadd [#allocation5], %s18
      %s21 = sshll.u32 %s1, 4
      %s22 = int_to_ptr.vmem [resolvable:$true] %s21
      %24 = dma.vmem_to_smem %s22, 16, [#allocation4], [#allocation5]
    $region9: #{tpu_custom_call.1} parent=1 // pred_fallthru
      _
    // Predicated region
    $region10: #{tpu_custom_call.1} parent=1 // pred_check
      _
    $region11: #{tpu_custom_call.1} parent=1 // pred_check_branch
      %26 = sbr.rel (0) target = $region13
    $region12: #{tpu_custom_call.1} parent=1 // pred_region
      _
    $region13: #{tpu_custom_call.1} parent=1 // pred_fallthru
      _
    // Predicated region
    $region14: #{tpu_custom_call.1} parent=1 // pred_check
      _
    $region15: #{tpu_custom_call.1} parent=1 // pred_check_branch
      %28 = sbr.rel (0) target = $region17
    $region16: #{tpu_custom_call.1} parent=1 // pred_region
      _
    $region17: #{tpu_custom_call.1} parent=1 // pred_fallthru
      _
    // Predicated region
    $region18: #{tpu_custom_call.1} parent=1 // pred_check
      _
    $region19: #{tpu_custom_call.1} parent=1 // pred_check_branch
      %30 = sbr.rel (0) target = $region21
    $region20: #{tpu_custom_call.1} parent=1 // pred_region
      _
    $region21: #{tpu_custom_call.1} parent=1 // pred_fallthru
      _
    // Predicated region
    $region22: #{tpu_custom_call.1} parent=1 // pred_check
      _
    $region23: #{tpu_custom_call.1} parent=1 // pred_check_branch
      %32 = sbr.rel (0) target = $region25
    $region24: #{tpu_custom_call.1} parent=1 // pred_region
      _
    $region25: #{tpu_custom_call.1} parent=1 // pred_fallthru
      _
    // Predicated region
    $region26: #{tpu_custom_call.1} parent=1 // pred_check
      _
    $region27: #{tpu_custom_call.1} parent=1 // pred_check_branch
      %34 = sbr.rel (0) target = $region29
    $region28: #{tpu_custom_call.1} parent=1 // pred_region
      %35 = dma.done [#allocation5], 16
    $region29: #{tpu_custom_call.1} parent=1 // pred_fallthru
      _
    %36 = sfence
    %p37 = scmp.eq.s32.totalorder 0, 0
    // Predicated region
    $region30: #{tpu_custom_call.1} parent=1 // pred_check
      %p38 = pneg %p37
    $region31: #{tpu_custom_call.1} parent=1 // pred_check_branch
      %40 = sbr.rel (%p38) target = $region33
    $region32: #{tpu_custom_call.1} parent=1 // pred_region
      %41 = vst [vmem:[#allocation2] sm:$0xff] 0.0
    $region33: #{tpu_custom_call.1} parent=1 // pred_fallthru
      _
    %s42 = smul.u32 0, 128
    %s43 = sld [smem:[#allocation3]]
    %p44 = scmp.le.s32.totalorder %s42, %s43
    // Predicated region
    $region34: #{tpu_custom_call.1} parent=1 // pred_check
      %p45 = pneg %p44
    $region35: #{tpu_custom_call.1} parent=1 // pred_check_branch
      %47 = sbr.rel (%p45) target = $region37
    $region36: #{tpu_custom_call.1} parent=1 // pred_region
      %s48 = sld [smem:[#allocation4 + $0x5]]
      %v49 = vld [vmem:[%s3] sm:$0xff]
      %v50 = vld [vmem:[%s2] sm:$0x1]
      %v51 = vld [vmem:[%s2 + $0x1] sm:$0x1]
      %v52 = vld [vmem:[%s2 + $0x2] sm:$0x1]
      %54 = vset.pattern.permute.xlu0 0
      %55 = vperm.xlu0 %54, %v49
      %v56 = vpop.permute.xlu0 %55
      %v58 = vlaneseq
      %v59 = vshrl.u32 %v58, 7
      %v60 = vsub.s32 0, %v59
      %v61 = vrot.slane %v52, %v60
      %v62 = vsub.f32 %v56, %v61
      %v63 = vlaneseq
      %v64 = vshrl.u32 %v63, 7
      %v65 = vsub.s32 0, %v64
      %v66 = vrot.slane %v51, %v65
      %v67 = vmul.f32 %v66, %v62
      %v68 = vmax.f32 %v67, 0.0
      %s69 = ssub.f32 0.0, %s48
      %v70 = vadd.f32 %v68, 1.0
      %v71 = vlog2.pop %v70
      %v72 = vmul.f32 %v71, 0.6931472
      %v73 = vstv %s69
      %v74 = vmul.f32 %v73, %v72
      %v75 = vmul.f32 %v74, 1.442695
      %v76 = vpow.pop %v75
      %v77 = vsub.f32 1.0, %v76
      %v78 = vld [vmem:[#allocation2] sm:$0xff]
      %v79 = vlaneseq
      %v80 = vshrl.u32 %v79, 7
      %v81 = vsub.s32 0, %v80
      %v82 = vrot.slane %v50, %v81
      %v83 = vmul.f32 %v82, %v77
      %v84 = vadd.f32 %v78, %v83
      %85 = vst [vmem:[#allocation2] sm:$0xff] %v84
    $region37: #{tpu_custom_call.1} parent=1 // pred_fallthru
      _
    // Predicated region
    $region38: #{tpu_custom_call.1} parent=1 // pred_check
      %p86 = pneg %p37
    $region39: #{tpu_custom_call.1} parent=1 // pred_check_branch
      %88 = sbr.rel (%p86) target = $region41
    $region40: #{tpu_custom_call.1} parent=1 // pred_region
      %s89 = sld [smem:[#allocation4 + $0x3]]
      %v90 = vld [vmem:[#allocation2] sm:$0xff]
      %91 = vadd.xlane.f32.xlu0 %v90
      %v92 = vpop.xlane.xlu0 %91
      %v93 = vld [vmem:[%s4] sm:$0xff]
      %v94 = vstv %s89
      %v95 = vmul.f32 %v94, %v92
      %v96 = vadd.f32 %v93, %v95
      %v97 = vmax.f32 %v96, 1e-10
      %v98 = vld [vmem:[%s5] sm:$0xff]
      %v99 = vlog2.pop %v97
      %v100 = vmul.f32 %v99, 0.6931472
      %v101 = vsub.f32 %v98, %v100
      %v102 = vand.u32 2147483647, %v101
      %vm103 = vcmp.le.f32.partialorder %v102, 0.001
      %v104 = vmul.f32 %v101, 0.5
      %v105 = vmul.f32 %v104, %v101
      %v106 = vsub.f32 %v102, 0.0005
      %v107 = vmul.f32 %v106, 0.001
      %v108 = vsel %vm103, %v105, %v107
      %vm109 = vcmask 7168
      %110 = vst.msk [vmem:[%s6] sm:$0xff] %vm109, %v108
    $region41: #{tpu_custom_call.1} parent=1 // pred_fallthru
      _
    // Predicated region
    $region42: #{tpu_custom_call.1} parent=1 // pred_check
      _
    $region43: #{tpu_custom_call.1} parent=1 // pred_check_branch
      %112 = sbr.rel (0) target = $region45
    $region44: #{tpu_custom_call.1} parent=1 // pred_region
      _
    $region45: #{tpu_custom_call.1} parent=1 // pred_fallthru
      _
    // Predicated region
    $region46: #{tpu_custom_call.1} parent=1 // pred_check
      _
    $region47: #{tpu_custom_call.1} parent=1 // pred_check_branch
      %114 = sbr.rel (0) target = $region49
    $region48: #{tpu_custom_call.1} parent=1 // pred_region
      _
    $region49: #{tpu_custom_call.1} parent=1 // pred_fallthru
      _
    %115 = vsyncpa [#allocation5], 1

</llo_original>
